<compile_context>
chip_gen: v7x
topology: tpu7x:2x2x1
jax: 0.10.0
libtpu: 0.0.40
codegen_flags: <defaults>
</compile_context>

<pallas_src>
import functools

import jax
import jax.numpy as jnp
from jax.experimental import pallas as pl
from jax.experimental.pallas import tpu as pltpu


# ---------------------------------------------------------------------------
# Kernels.  Grid = (N-tiles, layers 0..layer_id); one step = one layer applied
# to one N-tile.  The running hidden state is carried across the layer axis in
# a per-tile VMEM scratch; only the kept layer is written back to HBM.
# ---------------------------------------------------------------------------

def _encoder_kernel_resident(x_ref, w_ref, b_ref, out_ref, h_scratch):
    """Weight/bias stacks fully VMEM-resident.

    x_ref:     (TN, Hp)         bf16 input frames for this N-tile
    w_ref:     (L_used, Hp, Hp) bf16 weight stack (DMA'd once for the grid)
    b_ref:     (L_used, 1, Hp)  f32 bias stack
    out_ref:   (TN, Hp)         f32 activations of the kept layer
    h_scratch: (TN, Hp)         bf16 running hidden state (layer-axis carry)
    """
    layer = pl.program_id(1)
    last = pl.num_programs(1) - 1

    # Seed the carry with this N-tile's input on the first layer step.
    # (Kept as a once-per-tile guarded copy: ~Hp^-1 of one layer's matmul cost,
    #  and avoids a result-carrying conditional on the matmul LHS.)
    @pl.when(layer == 0)
    def _():
        h_scratch[...] = x_ref[...]

    z = jnp.dot(h_scratch[...], w_ref[layer],
                preferred_element_type=jnp.float32) + b_ref[layer]
    h = jnp.tanh(z)

    @pl.when(layer < last)
    def _():
        h_scratch[...] = h.astype(h_scratch.dtype)

    # Only the kept layer (last grid step along the layer axis) is stored.
    @pl.when(layer == last)
    def _():
        out_ref[...] = h.astype(out_ref.dtype)


def _encoder_kernel_streaming(x_ref, w_ref, b_ref, out_ref, h_scratch):
    """Per-layer weight-streaming fallback (weight stack too big for VMEM).

    w_ref: (Hp, Hp) this layer's weight;  b_ref: (1, Hp) this layer's bias.
    """
    layer = pl.program_id(1)
    last = pl.num_programs(1) - 1

    @pl.when(layer == 0)
    def _():
        h_scratch[...] = x_ref[...]

    z = jnp.dot(h_scratch[...], w_ref[...],
                preferred_element_type=jnp.float32) + b_ref[...]
    h = jnp.tanh(z)

    @pl.when(layer < last)
    def _():
        h_scratch[...] = h.astype(h_scratch.dtype)

    @pl.when(layer == last)
    def _():
        out_ref[...] = h.astype(out_ref.dtype)


# ---------------------------------------------------------------------------
# Wrapper.
# ---------------------------------------------------------------------------

def _round_up(x, m):
    return (x + m - 1) // m * m


def _pad_to(x, shape):
    if tuple(x.shape) == tuple(shape):
        return x
    return jnp.zeros(shape, x.dtype).at[tuple(slice(0, s) for s in x.shape)].set(x)


def _vmem_capacity_bytes():
    try:
        return int(pltpu.get_tpu_info().vmem_capacity_bytes)
    except Exception:
        return 64 * 1024 * 1024   # v7x per-TC VMEM — the smallest current gen.


def prepare_encoder_params(weights, biases, layer_id):
    """One-time (frozen-encoder) prep: slice to layers 0..layer_id, cast the
    weights to bf16 for the MXU, zero-pad hidden to Hp (lane-dense, 256-aligned
    for the 256x256 MXUs on v6e/v7x).  Hoisted out of the jitted forward so it
    is not redone on every call."""
    L, H, _ = weights.shape
    assert 0 <= layer_id < L
    L_used = layer_id + 1
    Hp = _round_up(H, 256)
    w = _pad_to(weights[:L_used].astype(jnp.bfloat16), (L_used, Hp, Hp))
    b = _pad_to(biases[:L_used].astype(jnp.float32).reshape(L_used, 1, H),
                (L_used, 1, Hp))
    return w, b


def keep_one_layer_forward(wav, w_pad, b_pad, layer_id, wav_lens=None,
                           tile_n=None):
    """Pallas equivalent of KeepOneLayer.forward.  layer_id must be static;
    (w_pad, b_pad) come from prepare_encoder_params."""
    del wav_lens  # TODO(synk): length masking not modelled (see header note).
    B, T, H = wav.shape
    L_used, Hp, _ = w_pad.shape
    N = B * T

    # --- per-generation VMEM budgeting: strategy + N-tile size --------------
    cap = _vmem_capacity_bytes()
    budget = int(cap * 0.75)        # headroom for Mosaic internal scratch etc.

    def vmem_bytes(tn, resident):
        w_bytes = (2 * L_used * Hp * Hp * 2 + 2 * L_used * Hp * 4 if resident
                   else 2 * Hp * Hp * 2 + 2 * Hp * 4)   # double-buffered blocks
        return (w_bytes
                + 2 * tn * Hp * 2      # x blocks (bf16, double-buffered)
                + 2 * tn * Hp * 4      # out blocks (f32, double-buffered)
                + tn * Hp * 2)         # bf16 hidden-state carry scratch

    # Prefer VMEM-resident weights: weight HBM traffic becomes 1x (not
    # n_tiles x) and the kernel is MXU-bound at any reasonable TN.
    resident = vmem_bytes(256, resident=True) <= budget
    if tile_n is None:
        # Resident: TN only amortizes the ~0.35us per-grid-step overhead.
        # Streaming: need TN >= ~680 rows (v6e) / ~620 (v7x) to hide weight DMA
        # (v5e is already compute-bound at ~256; larger TN is harmless there).
        tile_n = 512 if resident else 1024
    TN = min(_round_up(tile_n, 8), _round_up(N, 8))
    while TN > 8 and vmem_bytes(TN, resident) > budget:
        TN //= 2
    TN = max(_round_up(TN, 8), 8)

    Np = _round_up(N, TN)
    n_tiles = Np // TN
    vmem_limit = int(min(cap - (4 << 20),
                         max(vmem_bytes(TN, resident) + (6 << 20), 16 << 20)))

    # --- operand prep (zero padding is exact: padded rows/cols stay zero) ---
    x = _pad_to(wav.reshape(N, H).astype(jnp.bfloat16), (Np, Hp))

    if resident:
        kernel = _encoder_kernel_resident
        # Constant block index -> the stack is DMA'd from HBM exactly once.
        # TODO(synk): pipeline_mode=pl.Buffered(1) would drop the (never-used)
        # second buffer; left at the default for lowering portability.
        w_spec = pl.BlockSpec((L_used, Hp, Hp), lambda i, l: (0, 0, 0))
        b_spec = pl.BlockSpec((L_used, 1, Hp), lambda i, l: (0, 0, 0))
        weight_reads = 1
    else:
        kernel = _encoder_kernel_streaming
        w_spec = pl.BlockSpec((None, Hp, Hp), lambda i, l: (l, 0, 0))
        b_spec = pl.BlockSpec((None, 1, Hp), lambda i, l: (l, 0, 0))
        weight_reads = n_tiles

    cost = pl.CostEstimate(
        flops=2 * L_used * Np * Hp * Hp,
        transcendentals=L_used * Np * Hp,                 # tanh
        bytes_accessed=int(Np * Hp * 2                    # x read (bf16)
                           + Np * Hp * 4                  # kept layer (f32 out)
                           + weight_reads * L_used * Hp * Hp * 2
                           + weight_reads * L_used * Hp * 4),
    )

    out = pl.pallas_call(
        kernel,
        out_shape=jax.ShapeDtypeStruct((Np, Hp), jnp.float32),
        grid_spec=pltpu.PrefetchScalarGridSpec(
            num_scalar_prefetch=0,
            grid=(n_tiles, L_used),
            in_specs=[
                # x: one block per N-tile, constant across the layer axis.
                pl.BlockSpec((TN, Hp), lambda i, l: (i, 0)),
                w_spec,
                b_spec,
            ],
            out_specs=pl.BlockSpec((TN, Hp), lambda i, l: (i, 0)),
            scratch_shapes=[pltpu.VMEM((TN, Hp), jnp.bfloat16)],
        ),
        compiler_params=pltpu.CompilerParams(
            # N-tiles are independent (v7x megacore-shardable); layers are a
            # sequential carried recurrence.
            dimension_semantics=("parallel", "arbitrary"),
            vmem_limit_bytes=vmem_limit,
        ),
        cost_estimate=cost,
    )(x, w_pad, b_pad)

    hidden_sel = out[:N, :H].reshape(B, T, H)
    return layer_id, hidden_sel


def _reference_forward(wav, weights, biases, layer_id):
    """Pure-JAX reference (same bf16-matmul / f32-accumulate recipe)."""
    B, T, H = wav.shape
    h = wav.reshape(B * T, H).astype(jnp.float32)
    for l in range(layer_id + 1):
        z = jnp.dot(h.astype(jnp.bfloat16), weights[l].astype(jnp.bfloat16),
                    preferred_element_type=jnp.float32) + biases[l][None, :]
        h = jnp.tanh(z)
    return layer_id, h.reshape(B, T, H)


if __name__ == "__main__":
    # Small shapes consistent with a speech-encoder style forward:
    # batch=2, seq=8 frames, hidden=32 features, 4 encoder layers, keep layer 2.
    B, T, H, L = 2, 8, 32, 4
    LAYER_ID = 2

    key = jax.random.PRNGKey(0)
    k_wav, k_w, k_b = jax.random.split(key, 3)

    wav = jax.random.normal(k_wav, (B, T, H), dtype=jnp.float32)
    weights = jax.random.normal(k_w, (L, H, H), dtype=jnp.float32) * (1.0 / jnp.sqrt(H))
    biases = jax.random.normal(k_b, (L, H), dtype=jnp.float32) * 0.01

    # Frozen encoder: build the padded bf16 weight stack once, outside the
    # jitted forward (review item: hoist per-call weight prep).
    w_pad, b_pad = jax.block_until_ready(
        prepare_encoder_params(weights, biases, LAYER_ID))

    fwd = jax.jit(functools.partial(keep_one_layer_forward, layer_id=LAYER_ID))
    layer_id_out, hidden_sel = fwd(wav, w_pad, b_pad)
    hidden_sel = jax.block_until_ready(hidden_sel)

    ref_id, ref_hidden = _reference_forward(wav, weights, biases, LAYER_ID)
    assert int(layer_id_out) == ref_id
    assert hidden_sel.shape == (B, T, H)
    assert jnp.allclose(hidden_sel, ref_hidden, atol=1e-3, rtol=1e-3), (
        float(jnp.max(jnp.abs(hidden_sel - ref_hidden))))

    print("KERNEL_OK")
</pallas_src>

<mosaic_0001>
module attributes {stable_mosaic.version = 11 : i64} {
  func.func @_encoder_kernel_resident(%arg0: i32, %arg1: i32, %arg2: memref<16x256xbf16, #tpu.memory_space<vmem>>, %arg3: memref<3x256x256xbf16, #tpu.memory_space<vmem>>, %arg4: memref<3x1x256xf32, #tpu.memory_space<vmem>>, %arg5: memref<16x256xf32, #tpu.memory_space<vmem>>, %arg6: memref<16x256xbf16, #tpu.memory_space<vmem>>) attributes {dimension_semantics = [#tpu.dimension_semantics<parallel>, #tpu.dimension_semantics<arbitrary>], iteration_bounds = array<i64: 1, 3>, scalar_prefetch = 0 : i64, scratch_operands = 1 : i64, tpu.core_type = #tpu.core_type<tc>, window_params = [{transform_indices = @transform_0, window_bounds = array<i64: 16, 256>}, {pipeline_mode = #tpu.pipeline_mode<synchronous>, transform_indices = @transform_1, window_bounds = array<i64: 3, 256, 256>}, {pipeline_mode = #tpu.pipeline_mode<synchronous>, transform_indices = @transform_2, window_bounds = array<i64: 3, 1, 256>}, {transform_indices = @transform_3, window_bounds = array<i64: 16, 256>}]} {
    %c0_i32 = arith.constant 0 : i32
    %0 = arith.cmpi eq, %arg1, %c0_i32 : i32
    %1 = arith.extui %0 : i1 to i32
    %c0_i32_0 = arith.constant 0 : i32
    %2 = arith.cmpi ne, %1, %c0_i32_0 : i32
    scf.if %2 {
      %c0_9 = arith.constant 0 : index
      %c0_10 = arith.constant 0 : index
      %20 = vector.load %arg2[%c0_9, %c0_10] : memref<16x256xbf16, #tpu.memory_space<vmem>>, vector<16x256xbf16>
      %c0_11 = arith.constant 0 : index
      %c0_12 = arith.constant 0 : index
      %21 = vector.load %arg6[%c0_11, %c0_12] : memref<16x256xbf16, #tpu.memory_space<vmem>>, vector<16x256xbf16>
      tpu.vector_store %arg6[%c0_11, %c0_12], %20 {strides = array<i32>} : memref<16x256xbf16, #tpu.memory_space<vmem>>, vector<16x256xbf16>,
    } else {
    }
    %c0 = arith.constant 0 : index
    %c0_1 = arith.constant 0 : index
    %3 = vector.load %arg6[%c0, %c0_1] : memref<16x256xbf16, #tpu.memory_space<vmem>>, vector<16x256xbf16>
    %4 = arith.index_cast %arg1 : i32 to index
    %c0_2 = arith.constant 0 : index
    %c0_3 = arith.constant 0 : index
    %5 = vector.load %arg3[%4, %c0_2, %c0_3] : memref<3x256x256xbf16, #tpu.memory_space<vmem>>, vector<1x256x256xbf16>
    %6 = vector.shape_cast %5 : vector<1x256x256xbf16> to vector<256x256xbf16>
    %cst = arith.constant dense<0.000000e+00> : vector<16x256xf32>
    %7 = tpu.matmul %3, %6, %cst {dimension_numbers = #tpu.dot_dimension_numbers<[1], [0], [0], [1], [0, 0, 1, 1], [], []>} : vector<16x256xbf16>, vector<256x256xbf16>, vector<16x256xf32> -> vector<16x256xf32>
    %8 = arith.index_cast %arg1 : i32 to index
    %c0_4 = arith.constant 0 : index
    %c0_5 = arith.constant 0 : index
    %9 = vector.load %arg4[%8, %c0_4, %c0_5] : memref<3x1x256xf32, #tpu.memory_space<vmem>>, vector<1x1x256xf32>
    %10 = vector.shape_cast %9 : vector<1x1x256xf32> to vector<1x256xf32>
    %11 = vector.broadcast %10 : vector<1x256xf32> to vector<16x256xf32>
    %12 = arith.addf %7, %11 : vector<16x256xf32>
    %13 = math.tanh %12 : vector<16x256xf32>
    %c2_i32 = arith.constant 2 : i32
    %14 = arith.cmpi slt, %arg1, %c2_i32 : i32
    %15 = arith.extui %14 : i1 to i32
    %c0_i32_6 = arith.constant 0 : i32
    %16 = arith.cmpi ne, %15, %c0_i32_6 : i32
    scf.if %16 {
      %20 = arith.truncf %13 : vector<16x256xf32> to vector<16x256xbf16>
      %c0_9 = arith.constant 0 : index
      %c0_10 = arith.constant 0 : index
      %21 = vector.load %arg6[%c0_9, %c0_10] : memref<16x256xbf16, #tpu.memory_space<vmem>>, vector<16x256xbf16>
      tpu.vector_store %arg6[%c0_9, %c0_10], %20 {strides = array<i32>} : memref<16x256xbf16, #tpu.memory_space<vmem>>, vector<16x256xbf16>,
    } else {
    }
    %c2_i32_7 = arith.constant 2 : i32
    %17 = arith.cmpi eq, %arg1, %c2_i32_7 : i32
    %18 = arith.extui %17 : i1 to i32
    %c0_i32_8 = arith.constant 0 : i32
    %19 = arith.cmpi ne, %18, %c0_i32_8 : i32
    scf.if %19 {
      %c0_9 = arith.constant 0 : index
      %c0_10 = arith.constant 0 : index
      %20 = vector.load %arg5[%c0_9, %c0_10] : memref<16x256xf32, #tpu.memory_space<vmem>>, vector<16x256xf32>
      tpu.vector_store %arg5[%c0_9, %c0_10], %13 {strides = array<i32>} : memref<16x256xf32, #tpu.memory_space<vmem>>, vector<16x256xf32>,
    } else {
    }
    return
  }
  func.func @transform_0(%arg0: i32, %arg1: i32) -> (i32, i32) {
    %c0_i32 = arith.constant 0 : i32
    %c0_i32_0 = arith.constant 0 : i32
    return %arg0, %c0_i32 : i32, i32
  }
  func.func @transform_1(%arg0: i32, %arg1: i32) -> (i32, i32, i32) {
    %c0_i32 = arith.constant 0 : i32
    %c0_i32_0 = arith.constant 0 : i32
    %c0_i32_1 = arith.constant 0 : i32
    %c0_i32_2 = arith.constant 0 : i32
    return %c0_i32, %c0_i32_0, %c0_i32_1 : i32, i32, i32
  }
  func.func @transform_2(%arg0: i32, %arg1: i32) -> (i32, i32, i32) {
    %c0_i32 = arith.constant 0 : i32
    %c0_i32_0 = arith.constant 0 : i32
    %c0_i32_1 = arith.constant 0 : i32
    %c0_i32_2 = arith.constant 0 : i32
    return %c0_i32, %c0_i32_0, %c0_i32_1 : i32, i32, i32
  }
  func.func @transform_3(%arg0: i32, %arg1: i32) -> (i32, i32) {
    %c0_i32 = arith.constant 0 : i32
    %c0_i32_0 = arith.constant 0 : i32
    return %arg0, %c0_i32 : i32, i32
  }
}

</mosaic_0001>

<llo_original>
// kernel: keep_one_layer_forward.1
$region0: #{keep_one_layer_forward.1}
  #allocation0 [shape = 'u32[]', space=smem, size = 0x4, offset = 0x4, fixed_abs, tag = 'smem constant byte address 0x4 - core index']
  #allocation1 [shape = 'u32[144,128]{1,0:T(1,128)}', space=vmem, size = 0x12000, scoped, tag = 'internal scratch']
  #allocation2 [shape = 'bf16[16,256]{1,0:T(16,128)(2,1)}', space=vmem, size = 0x2000, scoped, tag = 'scratch operand']
  %s0 = inlined_call_operand.vmem [shape: bf16[16,256], index: 0, kind: input, shape index: {}]
  %s1 = inlined_call_operand.hbm [shape: bf16[3,256,256], index: 1, kind: input, shape index: {}]
  %s2 = inlined_call_operand.vmem [shape: f32[3,1,256], index: 2, kind: input, shape index: {}]
  %s3 = inlined_call_operand.vmem [shape: f32[16,256], index: 3, kind: output, shape index: {}]
  %s4 = sld [smem:[#allocation0]]
  $region61: #{keep_one_layer_forward.1} parent=0
    _
  %s6 = ssub.s32 1, %s4
  %s7 = scalar_select 0, %s6, %s4
  $region1: #{keep_one_layer_forward.1} parent=0
    #allocation3 [shape = 'u8[393216]{0}', space=vmem, size = 0x60000, scoped, tag = 'input window, operand 1, single buffered']
    #allocation4 [shape = 's32[2]{0}', space=sflag, size = 0x8, scoped, tag = 'scoped memory for keep_one_layer_forward.1']
    %8 = vsyncpa [#allocation4], 0
    loop: start=0, step=1, limit=5
    $region2: #{keep_one_layer_forward.1} parent=1 // loop_pre_header
      _
    $region3: #{keep_one_layer_forward.1} parent=1 // loop_header
      %s10 = sphi 0, %s14
      %p11 = scmp.ge.s32.totalorder %s10, 5
      %s17 = sphi 0, %s29
      %s18 = sphi 0, %s25
      %s19 = sphi 0, %s17
      %s20 = sphi 0, %s18
      %s21 = sphi 0, %s19
      %s22 = sphi 0, %s20
      %s32 = sphi 0, %s34
      %s35 = sphi 0, %s32
      %s36 = sphi 0, %s35
      %s52 = sphi 0, %s36
      %s56 = sphi 0, %s56
      %s58 = sphi 0, %s56
      %s59 = sphi 0, %s58
      %s73 = sphi 0, %s59
      %s77 = sphi 0, %s77
      %s79 = sphi 0, %s77
      %s80 = sphi 0, %s79
      %s94 = sphi 0, %s80
      %s100 = sphi 0, %s102
      %s103 = sphi 0, %s100
      %s104 = sphi 0, %s103
      %s120 = sphi 0, %s104
    $region4: #{keep_one_layer_forward.1} parent=1 // loop_header_branch
      %13 = sbr.rel (%p11) target = $region8
    $region5: #{keep_one_layer_forward.1} parent=1 // loop_body
      %s15 = ssub.s32 %s10, 1
      %s16 = ssub.s32 %s10, 2
      %s23 = sadd.s32 1, %s18
      %p24 = scmp.ge.s32.totalorder %s23, 3
      %s25 = scalar_select %p24, 0, %s23
      %s26 = sadd.s32 1, %s17
      %s27 = scalar_select %p24, %s26, %s17
      %p28 = scmp.ge.s32.totalorder %s27, 1
      %s29 = scalar_select %p28, 0, %s27
      %s30 = ssub.s32 %s17, %s29
      %p31 = scmp.eq.s32.totalorder %s30, 0
      %s33 = sadd.s32 %s32, 1
      %s34 = scalar_select %p31, %s32, %s33
      %p37 = pneg %p31
      %p38 = scmp.eq.s32.totalorder %s10, 2
      %p39 = por %p37, %p38
      %p40 = scmp.ne.s32.totalorder %s32, %s35
      %p41 = scmp.eq.s32.totalorder %s10, 0
      %p42 = por %p40, %p41
      %p43 = scmp.ne.s32.totalorder %s32, %s35
      %p44 = scmp.eq.s32.totalorder %s15, 2
      %p45 = por %p43, %p44
      %p46 = scmp.ne.s32.totalorder %s35, %s36
      %p47 = scmp.eq.s32.totalorder %s15, 0
      %p48 = por %p46, %p47
      %p49 = scmp.ne.s32.totalorder %s35, %s36
      %p50 = scmp.eq.s32.totalorder %s16, 2
      %p51 = por %p49, %p50
      %p53 = scmp.ne.s32.totalorder %s36, %s52
      %p54 = scmp.eq.s32.totalorder %s16, 0
      %p55 = por %p53, %p54
      %s57 = sadd.s32 %s56, 1
      %p60 = scmp.eq.s32.totalorder %s10, 2
      %p61 = scmp.ne.s32.totalorder %s56, %s58
      %p62 = scmp.eq.s32.totalorder %s10, 0
      %p63 = por %p61, %p62
      %p64 = scmp.ne.s32.totalorder %s56, %s58
      %p65 = scmp.eq.s32.totalorder %s15, 2
      %p66 = por %p64, %p65
      %p67 = scmp.ne.s32.totalorder %s58, %s59
      %p68 = scmp.eq.s32.totalorder %s15, 0
      %p69 = por %p67, %p68
      %p70 = scmp.ne.s32.totalorder %s58, %s59
      %p71 = scmp.eq.s32.totalorder %s16, 2
      %p72 = por %p70, %p71
      %p74 = scmp.ne.s32.totalorder %s59, %s73
      %p75 = scmp.eq.s32.totalorder %s16, 0
      %p76 = por %p74, %p75
      %s78 = sadd.s32 %s77, 1
      %p81 = scmp.eq.s32.totalorder %s10, 2
      %p82 = scmp.ne.s32.totalorder %s77, %s79
      %p83 = scmp.eq.s32.totalorder %s10, 0
      %p84 = por %p82, %p83
      %p85 = scmp.ne.s32.totalorder %s77, %s79
      %p86 = scmp.eq.s32.totalorder %s15, 2
      %p87 = por %p85, %p86
      %p88 = scmp.ne.s32.totalorder %s79, %s80
      %p89 = scmp.eq.s32.totalorder %s15, 0
      %p90 = por %p88, %p89
      %p91 = scmp.ne.s32.totalorder %s79, %s80
      %p92 = scmp.eq.s32.totalorder %s16, 2
      %p93 = por %p91, %p92
      %p95 = scmp.ne.s32.totalorder %s80, %s94
      %p96 = scmp.eq.s32.totalorder %s16, 0
      %p97 = por %p95, %p96
      %s98 = ssub.s32 %s17, %s29
      %p99 = scmp.eq.s32.totalorder %s98, 0
      %s101 = sadd.s32 %s100, 1
      %s102 = scalar_select %p99, %s100, %s101
      %p105 = pneg %p99
      %p106 = scmp.eq.s32.totalorder %s10, 2
      %p107 = por %p105, %p106
      %p108 = scmp.ne.s32.totalorder %s100, %s103
      %p109 = scmp.eq.s32.totalorder %s10, 0
      %p110 = por %p108, %p109
      %p111 = scmp.ne.s32.totalorder %s100, %s103
      %p112 = scmp.eq.s32.totalorder %s15, 2
      %p113 = por %p111, %p112
      %p114 = scmp.ne.s32.totalorder %s103, %s104
      %p115 = scmp.eq.s32.totalorder %s15, 0
      %p116 = por %p114, %p115
      %p117 = scmp.ne.s32.totalorder %s103, %s104
      %p118 = scmp.eq.s32.totalorder %s16, 2
      %p119 = por %p117, %p118
      %p121 = scmp.ne.s32.totalorder %s104, %s120
      %p122 = scmp.eq.s32.totalorder %s16, 0
      %p123 = por %p121, %p122
      %p124 = scmp.le.s32.totalorder 1, %s10
      %p125 = scmp.lt.s32.totalorder %s10, 4
      %p126 = pnand %p124, %p125
      %p127 = pneg %p126
      // Predicated region
      $region9: #{keep_one_layer_forward.1} parent=5 // pred_check
        _
      $region10: #{keep_one_layer_forward.1} parent=5 // pred_check_branch
        %129 = sbr.rel (%p126) target = $region12
      $region11: #{keep_one_layer_forward.1} parent=5 // pred_region
        %s130 = ssub.s32 %s10, 1
        // Predicated region
        $region13: #{keep_one_layer_forward.1} parent=11 // pred_check
          %p131 = pneg %p48
        $region14: #{keep_one_layer_forward.1} parent=11 // pred_check_branch
          %133 = sbr.rel (%p131) target = $region16
        $region15: #{keep_one_layer_forward.1} parent=11 // pred_region
          %s134 = smul.u32 2, %s19
          %p135 = scmp.lt.s32.totalorder %s134, 1
          %s136 = scalar_select %p135, %s134, 1
          %s137 = smul.addr %s136, 2
          %s138 = smul.addr %s137, 4
          %s139 = scalar_lea.vmem %s0, %s138
          %s140 = smul.u32 2, %s19
        $region16: #{keep_one_layer_forward.1} parent=11 // pred_fallthru
          _
        // Predicated region
        $region17: #{keep_one_layer_forward.1} parent=11 // pred_check
          %p141 = pneg %p69
        $region18: #{keep_one_layer_forward.1} parent=11 // pred_check_branch
          %143 = sbr.rel (%p141) target = $region20
        $region19: #{keep_one_layer_forward.1} parent=11 // pred_region
          %s145 = ssub.s32 12288, 12288
          %146 = vsyncadd [#allocation4], %s145
          %s147 = sshll.u32 [#allocation3], 4
          %s148 = int_to_ptr.vmem [resolvable:$true] %s147
          %153 = dma.hbm_to_vmem [thread:$0]  %s1, 12288, %s148, [#allocation4], 128, 128, 8
        $region20: #{keep_one_layer_forward.1} parent=11 // pred_fallthru
          _
        // Predicated region
        $region21: #{keep_one_layer_forward.1} parent=11 // pred_check
          %p154 = pneg %p90
        $region22: #{keep_one_layer_forward.1} parent=11 // pred_check_branch
          %156 = sbr.rel (%p154) target = $region24
        $region23: #{keep_one_layer_forward.1} parent=11 // pred_region
          _
        $region24: #{keep_one_layer_forward.1} parent=11 // pred_fallthru
          _
      $region12: #{keep_one_layer_forward.1} parent=5 // pred_fallthru
        _
      %p157 = scmp.lt.s32.totalorder %s10, 3
      // Predicated region
      $region25: #{keep_one_layer_forward.1} parent=5 // pred_check
        %p158 = pneg %p157
      $region26: #{keep_one_layer_forward.1} parent=5 // pred_check_branch
        %160 = sbr.rel (%p158) target = $region28
      $region27: #{keep_one_layer_forward.1} parent=5 // pred_region
        _
      $region28: #{keep_one_layer_forward.1} parent=5 // pred_fallthru
        _
      %p161 = scmp.le.s32.totalorder 1, %s10
      %p162 = scmp.lt.s32.totalorder %s10, 4
      %p163 = pnand %p161, %p162
      %p164 = pneg %p163
      // Predicated region
      $region29: #{keep_one_layer_forward.1} parent=5 // pred_check
        _
      $region30: #{keep_one_layer_forward.1} parent=5 // pred_check_branch
        %166 = sbr.rel (%p163) target = $region32
      $region31: #{keep_one_layer_forward.1} parent=5 // pred_region
        %s167 = ssub.s32 %s10, 1
        // Predicated region
        $region33: #{keep_one_layer_forward.1} parent=31 // pred_check
          %p168 = pneg %p69
        $region34: #{keep_one_layer_forward.1} parent=31 // pred_check_branch
          %170 = sbr.rel (%p168) target = $region36
        $region35: #{keep_one_layer_forward.1} parent=31 // pred_region
          %171 = dma.done [#allocation4], 12288
        $region36: #{keep_one_layer_forward.1} parent=31 // pred_fallthru
          _
        %s172 = smul.u32 2, %s19
        %p173 = scmp.lt.s32.totalorder %s172, 1
        %s174 = scalar_select %p173, %s172, 1
        %s175 = smul.addr %s174, 2
        %s176 = smul.addr %s175, 4
        %s177 = scalar_lea.vmem %s0, %s176
        %p178 = pneg %p48
        %p179 = pneg %p45
        %p180 = pneg %p69
        %p181 = pneg %p66
        %p182 = pneg %p90
        %p183 = pneg %p87
        %p184 = pneg %p116
        %p185 = pneg %p113
        %s186 = smul.u32 2, %s19
        %p187 = scmp.lt.s32.totalorder %s186, 1
        %s188 = scalar_select %p187, %s186, 1
        %s189 = smul.addr %s188, 2
        %s190 = smul.addr %s189, 8
        %s191 = scalar_lea.vmem %s3, %s190
        %s192 = smul.u32 2, %s19
        %p193 = scmp.lt.s32.totalorder %s192, 1
        %s194 = scalar_select %p193, %s192, 1
        %s195 = smul.addr %s194, 2
        %s196 = smul.addr %s195, 4
        %s197 = scalar_lea.vmem %s0, %s196
        %s198 = smul.u32 2, %s19
        %s199 = smul.u32 2, %s19
        %p200 = scmp.lt.s32.totalorder %s199, 1
        %s201 = scalar_select %p200, %s199, 1
        %s202 = smul.addr %s201, 2
        %s203 = smul.addr %s202, 8
        %s204 = scalar_lea.vmem %s3, %s203
        %s205 = smul.u32 2, %s19
        %p206 = scmp.eq.s32.totalorder %s20, 0
        // Predicated region
        $region37: #{keep_one_layer_forward.1} parent=31 // pred_check
          %p207 = pneg %p206
        $region38: #{keep_one_layer_forward.1} parent=31 // pred_check_branch
          %209 = sbr.rel (%p207) target = $region40
        $region39: #{keep_one_layer_forward.1} parent=31 // pred_region
          %v210 = vld [vmem:[%s197] sm:$0xff]
          %v211 = vld [vmem:[%s197 + $0x8] sm:$0xff]
          %v214 = vunpack.c.l.b16 %v210
          %v215 = vunpack.c.h.b16 %v210
          %v216 = vunpack.c.l.b16 %v211
          %v217 = vunpack.c.h.b16 %v211
          %v218 = vpack.c.b16 %v216, %v214
          %v219 = vpack.c.b16 %v217, %v215
          %222 = vst [vmem:[#allocation2] sm:$0xff] %v218
          %223 = vst [vmem:[#allocation2 + $0x8] sm:$0xff] %v219
        $region40: #{keep_one_layer_forward.1} parent=31 // pred_fallthru
          _
        %v224 = vld [vmem:[#allocation2] sm:$0xff]
        %v225 = vld [vmem:[#allocation2 + $0x8] sm:$0xff]
        %s226 = smul.u32 %s20, 64
        %s227 = smul.addr %s226, 4
        %s228 = scalar_lea.vmem [#allocation3], %s227
        %v229 = vld [vmem:[%s228] sm:$0xff]
        %v230 = vld [vmem:[%s228 + $0x8] sm:$0xff]
        %v231 = vld [vmem:[%s228 + $0x10] sm:$0xff]
        %v232 = vld [vmem:[%s228 + $0x18] sm:$0xff]
        %v233 = vld [vmem:[%s228 + $0x20] sm:$0xff]
        %v234 = vld [vmem:[%s228 + $0x28] sm:$0xff]
        %v235 = vld [vmem:[%s228 + $0x30] sm:$0xff]
        %v236 = vld [vmem:[%s228 + $0x38] sm:$0xff]
        %v237 = vld [vmem:[%s228 + $0x40] sm:$0xff]
        %v238 = vld [vmem:[%s228 + $0x48] sm:$0xff]
        %v239 = vld [vmem:[%s228 + $0x50] sm:$0xff]
        %v240 = vld [vmem:[%s228 + $0x58] sm:$0xff]
        %v241 = vld [vmem:[%s228 + $0x60] sm:$0xff]
        %v242 = vld [vmem:[%s228 + $0x68] sm:$0xff]
        %v243 = vld [vmem:[%s228 + $0x70] sm:$0xff]
        %v244 = vld [vmem:[%s228 + $0x78] sm:$0xff]
        %v245 = vld [vmem:[%s228 + $0x80] sm:$0xff]
        %v246 = vld [vmem:[%s228 + $0x88] sm:$0xff]
        %v247 = vld [vmem:[%s228 + $0x90] sm:$0xff]
        %v248 = vld [vmem:[%s228 + $0x98] sm:$0xff]
        %v249 = vld [vmem:[%s228 + $0xa0] sm:$0xff]
        %v250 = vld [vmem:[%s228 + $0xa8] sm:$0xff]
        %v251 = vld [vmem:[%s228 + $0xb0] sm:$0xff]
        %v252 = vld [vmem:[%s228 + $0xb8] sm:$0xff]
        %v253 = vld [vmem:[%s228 + $0xc0] sm:$0xff]
        %v254 = vld [vmem:[%s228 + $0xc8] sm:$0xff]
        %v255 = vld [vmem:[%s228 + $0xd0] sm:$0xff]
        %v256 = vld [vmem:[%s228 + $0xd8] sm:$0xff]
        %v257 = vld [vmem:[%s228 + $0xe0] sm:$0xff]
        %v258 = vld [vmem:[%s228 + $0xe8] sm:$0xff]
        %v259 = vld [vmem:[%s228 + $0xf0] sm:$0xff]
        %v260 = vld [vmem:[%s228 + $0xf8] sm:$0xff]
        %s261 = smul.u32 %s20, 2
        %s262 = scalar_lea.vmem %s2, %s261
        %v263 = vld [vmem:[%s262] sm:$0x3]
        %v265 = vlaneseq
        %v266 = vshrl.u32 %v265, 7
        %v267 = vsub.s32 0, %v266
        %v268 = vrot.slane %v263, %v267
        %v269 = vlaneseq
        %v270 = vshrl.u32 %v269, 7
        %v271 = vsub.s32 1, %v270
        %v272 = vrot.slane %v263, %v271
        %v307 = vunpack.c.l.b16 %v229
        %v308 = vunpack.c.h.b16 %v229
        %v309 = vunpack.c.l.b16 %v230
        %v310 = vunpack.c.h.b16 %v230
        %v311 = vunpack.c.l.b16 %v231
        %v312 = vunpack.c.h.b16 %v231
        %v313 = vunpack.c.l.b16 %v232
        %v314 = vunpack.c.h.b16 %v232
        %v315 = vunpack.c.l.b16 %v233
        %v316 = vunpack.c.h.b16 %v233
        %v317 = vunpack.c.l.b16 %v234
        %v318 = vunpack.c.h.b16 %v234
        %v319 = vunpack.c.l.b16 %v235
        %v320 = vunpack.c.h.b16 %v235
        %v321 = vunpack.c.l.b16 %v236
        %v322 = vunpack.c.h.b16 %v236
        %v323 = vunpack.c.l.b16 %v237
        %v324 = vunpack.c.h.b16 %v237
        %v325 = vunpack.c.l.b16 %v238
        %v326 = vunpack.c.h.b16 %v238
        %v327 = vunpack.c.l.b16 %v239
        %v328 = vunpack.c.h.b16 %v239
        %v329 = vunpack.c.l.b16 %v240
        %v330 = vunpack.c.h.b16 %v240
        %v331 = vunpack.c.l.b16 %v241
        %v332 = vunpack.c.h.b16 %v241
        %v333 = vunpack.c.l.b16 %v242
        %v334 = vunpack.c.h.b16 %v242
        %v335 = vunpack.c.l.b16 %v243
        %v336 = vunpack.c.h.b16 %v243
        %v337 = vunpack.c.l.b16 %v244
        %v338 = vunpack.c.h.b16 %v244
        %v339 = vunpack.c.l.b16 %v245
        %v340 = vunpack.c.h.b16 %v245
        %v341 = vunpack.c.l.b16 %v246
        %v342 = vunpack.c.h.b16 %v246
        %v343 = vunpack.c.l.b16 %v247
        %v344 = vunpack.c.h.b16 %v247
        %v345 = vunpack.c.l.b16 %v248
        %v346 = vunpack.c.h.b16 %v248
        %v347 = vunpack.c.l.b16 %v249
        %v348 = vunpack.c.h.b16 %v249
        %v349 = vunpack.c.l.b16 %v250
        %v350 = vunpack.c.h.b16 %v250
        %v351 = vunpack.c.l.b16 %v251
        %v352 = vunpack.c.h.b16 %v251
        %v353 = vunpack.c.l.b16 %v252
        %v354 = vunpack.c.h.b16 %v252
        %v355 = vunpack.c.l.b16 %v253
        %v356 = vunpack.c.h.b16 %v253
        %v357 = vunpack.c.l.b16 %v254
        %v358 = vunpack.c.h.b16 %v254
        %v359 = vunpack.c.l.b16 %v255
        %v360 = vunpack.c.h.b16 %v255
        %v361 = vunpack.c.l.b16 %v256
        %v362 = vunpack.c.h.b16 %v256
        %v363 = vunpack.c.l.b16 %v257
        %v364 = vunpack.c.h.b16 %v257
        %v365 = vunpack.c.l.b16 %v258
        %v366 = vunpack.c.h.b16 %v258
        %v367 = vunpack.c.l.b16 %v259
        %v368 = vunpack.c.h.b16 %v259
        %v369 = vunpack.c.l.b16 %v260
        %v370 = vunpack.c.h.b16 %v260
        %v371 = vpack.c.b16 %v309, %v307
        %v372 = vpack.c.b16 %v310, %v308
        %v373 = vpack.c.b16 %v313, %v311
        %v374 = vpack.c.b16 %v314, %v312
        %v375 = vpack.c.b16 %v317, %v315
        %v376 = vpack.c.b16 %v318, %v316
        %v377 = vpack.c.b16 %v321, %v319
        %v378 = vpack.c.b16 %v322, %v320
        %v379 = vpack.c.b16 %v325, %v323
        %v380 = vpack.c.b16 %v326, %v324
        %v381 = vpack.c.b16 %v329, %v327
        %v382 = vpack.c.b16 %v330, %v328
        %v383 = vpack.c.b16 %v333, %v331
        %v384 = vpack.c.b16 %v334, %v332
        %v385 = vpack.c.b16 %v337, %v335
        %v386 = vpack.c.b16 %v338, %v336
        %v387 = vpack.c.b16 %v341, %v339
        %v388 = vpack.c.b16 %v342, %v340
        %v389 = vpack.c.b16 %v345, %v343
        %v390 = vpack.c.b16 %v346, %v344
        %v391 = vpack.c.b16 %v349, %v347
        %v392 = vpack.c.b16 %v350, %v348
        %v393 = vpack.c.b16 %v353, %v351
        %v394 = vpack.c.b16 %v354, %v352
        %v395 = vpack.c.b16 %v357, %v355
        %v396 = vpack.c.b16 %v358, %v356
        %v397 = vpack.c.b16 %v361, %v359
        %v398 = vpack.c.b16 %v362, %v360
        %v399 = vpack.c.b16 %v365, %v363
        %v400 = vpack.c.b16 %v366, %v364
        %v401 = vpack.c.b16 %v369, %v367
        %v402 = vpack.c.b16 %v370, %v368
        %435 = vmatprep.subr.bf16.mxu0 %v372
        %436 = vmatpush1.bf16.msra.mxu0 %v371
        %437 = vmatprep.subr.bf16.mxu0 %v374
        %438 = vmatpush1.bf16.msra.mxu0 %v373
        %439 = vmatprep.subr.bf16.mxu0 %v376
        %440 = vmatpush1.bf16.msra.mxu0 %v375
        %441 = vmatprep.subr.bf16.mxu0 %v378
        %442 = vmatpush1.bf16.msra.mxu0 %v377
        %443 = vmatprep.subr.bf16.mxu0 %v380
        %444 = vmatpush1.bf16.msra.mxu0 %v379
        %445 = vmatprep.subr.bf16.mxu0 %v382
        %446 = vmatpush1.bf16.msra.mxu0 %v381
        %447 = vmatprep.subr.bf16.mxu0 %v384
        %448 = vmatpush1.bf16.msra.mxu0 %v383
        %449 = vmatprep.subr.bf16.mxu0 %v386
        %450 = vmatpush1.bf16.msra.mxu0 %v385
        %451 = vmatprep.subr.bf16.mxu0 %v388
        %452 = vmatpush1.bf16.msra.mxu0 %v387
        %453 = vmatprep.subr.bf16.mxu0 %v390
        %454 = vmatpush1.bf16.msra.mxu0 %v389
        %455 = vmatprep.subr.bf16.mxu0 %v392
        %456 = vmatpush1.bf16.msra.mxu0 %v391
        %457 = vmatprep.subr.bf16.mxu0 %v394
        %458 = vmatpush1.bf16.msra.mxu0 %v393
        %459 = vmatprep.subr.bf16.mxu0 %v396
        %460 = vmatpush1.bf16.msra.mxu0 %v395
        %461 = vmatprep.subr.bf16.mxu0 %v398
        %462 = vmatpush1.bf16.msra.mxu0 %v397
        %463 = vmatprep.subr.bf16.mxu0 %v400
        %464 = vmatpush1.bf16.msra.mxu0 %v399
        %465 = vmatprep.subr.bf16.mxu0 %v402
        %466 = vmatpush1.bf16.msra.mxu0 %v401
        %467 = vmatprep.mubr.bf16.mxu0 %v225
        %468 = vmatmul.mubr.bf16.gmra.mrb[0].mxu0 %v224
        %v469 = vpop.f32.mrb[0].mxu0
        %v470 = vadd.f32 %v268, %v469
        %v471 = vpop.f32.mrb[0].mxu0
        %v472 = vadd.f32 %v272, %v471
        %v473 = vpop.f32.mrb[0].mxu0
        %v474 = vadd.f32 %v268, %v473
        %v475 = vpop.f32.mrb[0].mxu0
        %v476 = vadd.f32 %v272, %v475
        %477 = vdwg.mxu0
        %v478 = vtanh.pop %v470
        %v479 = vtanh.pop %v472
        %v480 = vtanh.pop %v474
        %v481 = vtanh.pop %v476
        %p482 = scmp.lt.s32.totalorder %s20, 2
        // Predicated region
        $region41: #{keep_one_layer_forward.1} parent=31 // pred_check
          %p483 = pneg %p482
        $region42: #{keep_one_layer_forward.1} parent=31 // pred_check_branch
          %485 = sbr.rel (%p483) target = $region44
        $region43: #{keep_one_layer_forward.1} parent=31 // pred_region
          %v486 = vpack.c.bf16 %v480, %v478
          %v487 = vpack.c.bf16 %v481, %v479
          %488 = vst [vmem:[#allocation2] sm:$0xff] %v486
          %489 = vst [vmem:[#allocation2 + $0x8] sm:$0xff] %v487
        $region44: #{keep_one_layer_forward.1} parent=31 // pred_fallthru
          _
        %p490 = scmp.eq.s32.totalorder %s20, 2
        // Predicated region
        $region45: #{keep_one_layer_forward.1} parent=31 // pred_check
          %p491 = pneg %p490
        $region46: #{keep_one_layer_forward.1} parent=31 // pred_check_branch
          %493 = sbr.rel (%p491) target = $region48
        $region47: #{keep_one_layer_forward.1} parent=31 // pred_region
          %494 = vst [vmem:[%s204] sm:$0xff] %v478
          %495 = vst [vmem:[%s204 + $0x8] sm:$0xff] %v479
          %496 = vst [vmem:[%s204 + $0x10] sm:$0xff] %v480
          %497 = vst [vmem:[%s204 + $0x18] sm:$0xff] %v481
        $region48: #{keep_one_layer_forward.1} parent=31 // pred_fallthru
          _
        %s498 = smul.u32 2, %s19
        %p499 = scmp.lt.s32.totalorder %s498, 1
        %s500 = scalar_select %p499, %s498, 1
        %s501 = smul.addr %s500, 2
        %s502 = smul.addr %s501, 8
        %s503 = scalar_lea.vmem %s3, %s502
        // Predicated region
        $region49: #{keep_one_layer_forward.1} parent=31 // pred_check
          %p504 = pneg %p113
        $region50: #{keep_one_layer_forward.1} parent=31 // pred_check_branch
          %506 = sbr.rel (%p504) target = $region52
        $region51: #{keep_one_layer_forward.1} parent=31 // pred_region
          %s507 = smul.u32 2, %s19
        $region52: #{keep_one_layer_forward.1} parent=31 // pred_fallthru
          _
        // Predicated region
        $region53: #{keep_one_layer_forward.1} parent=31 // pred_check
          %p508 = pneg %p113
        $region54: #{keep_one_layer_forward.1} parent=31 // pred_check_branch
          %510 = sbr.rel (%p508) target = $region56
        $region55: #{keep_one_layer_forward.1} parent=31 // pred_region
          %s511 = smul.u32 2, %s19
          %p512 = scmp.lt.s32.totalorder %s511, 1
          %s513 = scalar_select %p512, %s511, 1
          %s514 = smul.addr %s513, 2
          %s515 = smul.addr %s514, 8
          %s516 = scalar_lea.vmem %s3, %s515
        $region56: #{keep_one_layer_forward.1} parent=31 // pred_fallthru
          _
      $region32: #{keep_one_layer_forward.1} parent=5 // pred_fallthru
        _
      %p517 = scmp.le.s32.totalorder 2, %s10
      // Predicated region
      $region57: #{keep_one_layer_forward.1} parent=5 // pred_check
        %p518 = pneg %p517
      $region58: #{keep_one_layer_forward.1} parent=5 // pred_check_branch
        %520 = sbr.rel (%p518) target = $region60
      $region59: #{keep_one_layer_forward.1} parent=5 // pred_region
        %s521 = ssub.s32 %s10, 2
      $region60: #{keep_one_layer_forward.1} parent=5 // pred_fallthru
        _
    $region6: #{keep_one_layer_forward.1} parent=1 // loop_footer
      %s14 = sadd.s32 1, %s10
    $region7: #{keep_one_layer_forward.1} parent=1 // loop_footer_branch
      %9 = sbr.rel target = $region3
    $region8: #{keep_one_layer_forward.1} parent=1 // loop_exit
      _
    %522 = vsyncpa [#allocation4], 1
    %s523 = scalar_lea.sflag [#allocation4], 1
    %524 = vsyncpa %s523, 1

</llo_original>
